<compile_context>
chip_gen: v6e
topology: v6e:2x2x1
jax: 0.10.0
libtpu: 0.0.40
codegen_flags: <defaults>
</compile_context>

<pallas_src>
import jax
import jax.numpy as jnp
from jax.experimental import pallas as pl
from jax.experimental.pallas import tpu as pltpu

KH = KW = 3  # kernel_size=3


def conv_gemm_kernel(p_ref, w_ref, o_ref):
    # p_ref: (N, KP, MP)   padded im2col patches per image (lane-dense, MP % 128 == 0)
    #                      rows 0..K-1 = taps, row K = ones (bias), rest = zero pad
    # w_ref: (Cout, KP)    flattened conv weight, column K = bias*0.5, rest zero pad
    # o_ref: (N, Cout, MP) fused conv + bias + ReLU output
    w = w_ref[...]
    for n in range(p_ref.shape[0]):                 # N is tiny & static -> unrolled
        acc = jnp.dot(w, p_ref[n], preferred_element_type=jnp.float32)
        o_ref[n] = jnp.maximum(acc, 0.0).astype(o_ref.dtype)   # fused ReLU, one store


def conv_model_forward(x_nchw, w_oihw, bias):
    """ConvModel.forward. x_nchw: (N, Cin, H, W) f32 -> (N, Cout, Ho, Wo) f32."""
    N, Cin, H, W = x_nchw.shape
    Cout = w_oihw.shape[0]
    Ho, Wo = H - KH + 1, W - KW + 1
    Mimg = Ho * Wo                                  # lanes per image (196)
    K = KH * KW * Cin                               # taps (36)
    MP = pl.cdiv(Mimg, 128) * 128                   # padded lane dim   (256)
    KP = pl.cdiv(K + 1, 8) * 8                      # taps + bias row, sublane pad (40)

    x = x_nchw.astype(jnp.float32)

    # ---- wrapper-level layout plumbing (traced once, a handful of XLA ops) ----
    # im2col with n-major / (oh,ow)-minor columns and (kh,kw,c) rows:
    # 9 strided slices -> one stack -> one reshape (no per-tap transposes).
    taps = [x[:, :, dy:dy + Ho, dx:dx + Wo]                       # (N, Cin, Ho, Wo)
            for dy in range(KH) for dx in range(KW)]
    patches = jnp.stack(taps, axis=1).reshape(N, K, Mimg)         # (N, K, Ho*Wo)

    # Pad lanes to MP, append bias ones-row, zero-pad contraction rows to KP.
    patches_p = jnp.concatenate([
        jnp.pad(patches, ((0, 0), (0, 0), (0, MP - Mimg))),       # (N, K,        MP)
        jnp.ones((N, 1, MP), jnp.float32),                        # (N, 1,        MP)
        jnp.zeros((N, KP - K - 1, MP), jnp.float32),              # (N, KP-K-1,   MP)
    ], axis=1)                                                    # (N, KP,       MP)

    # (Cout, Cin, KH, KW) -> (Cout, KH, KW, Cin) -> (Cout, K); append b/2 column.
    # (conv(2x) + b) / 2 == conv(x) + b/2  (conv is linear; ReLU commutes) -> exact.
    w_flat = jnp.transpose(w_oihw, (0, 2, 3, 1)).reshape(Cout, K).astype(jnp.float32)
    wb = jnp.concatenate([
        w_flat,
        (bias.astype(jnp.float32) * 0.5).reshape(Cout, 1),
        jnp.zeros((Cout, KP - K - 1), jnp.float32),
    ], axis=1)                                                    # (Cout, KP)

    # ---- single kernel invocation: no grid, full arrays resident in VMEM ----
    out_p = pl.pallas_call(
        conv_gemm_kernel,
        out_shape=jax.ShapeDtypeStruct((N, Cout, MP), jnp.float32),
        in_specs=[
            pl.BlockSpec(memory_space=pltpu.MemorySpace.VMEM),
            pl.BlockSpec(memory_space=pltpu.MemorySpace.VMEM),
        ],
        out_specs=pl.BlockSpec(memory_space=pltpu.MemorySpace.VMEM),
    )(patches_p, wb)

    # (N, Cout, MP): drop padded lanes, free reshape to NCHW (no transpose).
    return out_p[:, :, :Mimg].reshape(N, Cout, Ho, Wo)


def reference_forward(x_nchw, w_oihw, bias):
    y = jax.lax.conv_general_dilated(
        x_nchw * 2.0, w_oihw, window_strides=(1, 1), padding="VALID",
        dimension_numbers=("NCHW", "OIHW", "NCHW"))
    y = (y + bias.reshape(1, -1, 1, 1)) / 2.0
    return jnp.maximum(y, 0.0)


if __name__ == "__main__":
    # Small shapes consistent with the module: batch=2, c_in=4, c_out=8, spatial=16.
    N, C_IN, C_OUT, H, W = 2, 4, 8, 16, 16

    key = jax.random.PRNGKey(0)
    kx, kw, kb = jax.random.split(key, 3)
    x = jax.random.normal(kx, (N, C_IN, H, W), dtype=jnp.float32)
    # Deterministic synthetic Conv2d parameters (same shapes as nn.Conv2d(c_in, c_out, 3)).
    w = 0.1 * jax.random.normal(kw, (C_OUT, C_IN, KH, KW), dtype=jnp.float32)
    b = 0.1 * jax.random.normal(kb, (C_OUT,), dtype=jnp.float32)

    out = jax.block_until_ready(conv_model_forward(x, w, b))
    ref = reference_forward(x, w, b)

    assert out.shape == (N, C_OUT, H - 2, W - 2), out.shape
    assert jnp.allclose(out, ref, atol=1e-4, rtol=1e-4), "mismatch vs reference"

    print("KERNEL_OK")
</pallas_src>

<mosaic_0001>
module attributes {stable_mosaic.version = 11 : i64} {
  func.func @conv_gemm_kernel(%arg0: memref<2x40x256xf32, #tpu.memory_space<vmem>>, %arg1: memref<8x40xf32, #tpu.memory_space<vmem>>, %arg2: memref<2x8x256xf32, #tpu.memory_space<vmem>>) attributes {dimension_semantics = [], scalar_prefetch = 0 : i64, scratch_operands = 0 : i64, tpu.core_type = #tpu.core_type<tc>} {
    %c0 = arith.constant 0 : index
    %c0_0 = arith.constant 0 : index
    %0 = vector.load %arg1[%c0, %c0_0] : memref<8x40xf32, #tpu.memory_space<vmem>>, vector<8x40xf32>
    %c0_1 = arith.constant 0 : index
    %c0_2 = arith.constant 0 : index
    %c0_3 = arith.constant 0 : index
    %1 = vector.load %arg0[%c0_1, %c0_2, %c0_3] : memref<2x40x256xf32, #tpu.memory_space<vmem>>, vector<1x40x256xf32>
    %2 = vector.shape_cast %1 : vector<1x40x256xf32> to vector<40x256xf32>
    %cst = arith.constant dense<0.000000e+00> : vector<8x256xf32>
    %3 = tpu.matmul %0, %2, %cst {dimension_numbers = #tpu.dot_dimension_numbers<[1], [0], [0], [1], [0, 0, 1, 1], [], []>} : vector<8x40xf32>, vector<40x256xf32>, vector<8x256xf32> -> vector<8x256xf32>
    %cst_4 = arith.constant 0.000000e+00 : f32
    %4 = vector.broadcast %cst_4 : f32 to vector<8x256xf32>
    %5 = arith.maximumf %3, %4 : vector<8x256xf32>
    %c0_5 = arith.constant 0 : index
    %c0_6 = arith.constant 0 : index
    %c0_7 = arith.constant 0 : index
    %6 = vector.load %arg2[%c0_5, %c0_6, %c0_7] : memref<2x8x256xf32, #tpu.memory_space<vmem>>, vector<1x8x256xf32>
    %7 = vector.shape_cast %6 : vector<1x8x256xf32> to vector<8x256xf32>
    %8 = vector.shape_cast %5 : vector<8x256xf32> to vector<1x8x256xf32>
    tpu.vector_store %arg2[%c0_5, %c0_6, %c0_7], %8 {strides = array<i32>} : memref<2x8x256xf32, #tpu.memory_space<vmem>>, vector<1x8x256xf32>,
    %c1 = arith.constant 1 : index
    %c0_8 = arith.constant 0 : index
    %c0_9 = arith.constant 0 : index
    %9 = vector.load %arg0[%c1, %c0_8, %c0_9] : memref<2x40x256xf32, #tpu.memory_space<vmem>>, vector<1x40x256xf32>
    %10 = vector.shape_cast %9 : vector<1x40x256xf32> to vector<40x256xf32>
    %cst_10 = arith.constant dense<0.000000e+00> : vector<8x256xf32>
    %11 = tpu.matmul %0, %10, %cst_10 {dimension_numbers = #tpu.dot_dimension_numbers<[1], [0], [0], [1], [0, 0, 1, 1], [], []>} : vector<8x40xf32>, vector<40x256xf32>, vector<8x256xf32> -> vector<8x256xf32>
    %cst_11 = arith.constant 0.000000e+00 : f32
    %12 = vector.broadcast %cst_11 : f32 to vector<8x256xf32>
    %13 = arith.maximumf %11, %12 : vector<8x256xf32>
    %c1_12 = arith.constant 1 : index
    %c0_13 = arith.constant 0 : index
    %c0_14 = arith.constant 0 : index
    %14 = vector.load %arg2[%c1_12, %c0_13, %c0_14] : memref<2x8x256xf32, #tpu.memory_space<vmem>>, vector<1x8x256xf32>
    %15 = vector.shape_cast %14 : vector<1x8x256xf32> to vector<8x256xf32>
    %16 = vector.shape_cast %13 : vector<8x256xf32> to vector<1x8x256xf32>
    tpu.vector_store %arg2[%c1_12, %c0_13, %c0_14], %16 {strides = array<i32>} : memref<2x8x256xf32, #tpu.memory_space<vmem>>, vector<1x8x256xf32>,
    return
  }
}

</mosaic_0001>

<llo_original>
// kernel: tpu_custom_call.1
$region0: #{tpu_custom_call.1}
  #allocation0 [shape = 'u32[]', space=smem, size = 0x4, offset = 0x4, fixed_abs, tag = 'smem constant byte address 0x4 - core index']
  #allocation1 [shape = 'u32[144,128]{1,0:T(1,128)}', space=vmem, size = 0x12000, scoped, tag = 'internal scratch']
  %s0 = inlined_call_operand.hbm [shape: f32[2,40,256], index: 0, kind: input, shape index: {}]
  %s1 = inlined_call_operand.hbm [shape: f32[8,40], index: 1, kind: input, shape index: {}]
  %s2 = inlined_call_operand.hbm [shape: f32[2,8,256], index: 2, kind: output, shape index: {}]
  %s3 = sld [smem:[#allocation0]]
  $region26: #{tpu_custom_call.1} parent=0
    _
  %s5 = ssub.s32 1, %s3
  %s6 = scalar_select 0, %s5, %s3
  $region1: #{tpu_custom_call.1} parent=0
    #allocation2 [shape = 'u8[81920]{0}', space=vmem, size = 0x14000, scoped, tag = 'input window, operand 0, single buffered']
    #allocation3 [shape = 's32[1]{0}', space=sflag, size = 0x4, scoped, tag = 'scoped memory for tpu_custom_call.1']
    #allocation4 [shape = 's32[1]{0}', space=sflag, size = 0x4, scoped, tag = 'scoped memory for tpu_custom_call.1']
    #allocation5 [shape = 'u8[4096]{0}', space=vmem, size = 0x1000, scoped, tag = 'input window, operand 1, single buffered']
    #allocation6 [shape = 's32[1]{0}', space=sflag, size = 0x4, scoped, tag = 'scoped memory for tpu_custom_call.1']
    #allocation7 [shape = 'u8[16384]{0}', space=vmem, size = 0x4000, scoped, tag = 'output window, operand 0, single buffered']
    %7 = vsyncpa [#allocation3], 0
    %8 = vsyncpa [#allocation6], 0
    %9 = vsyncpa [#allocation4], 0
    // Predicated region
    $region2: #{tpu_custom_call.1} parent=1 // pred_check
      _
    $region3: #{tpu_custom_call.1} parent=1 // pred_check_branch
      %11 = sbr.rel (0) target = $region5
    $region4: #{tpu_custom_call.1} parent=1 // pred_region
      %s13 = ssub.s32 2560, 2560
      %14 = vsyncadd [#allocation3], %s13
      %s15 = sshll.u32 [#allocation2], 4
      %s16 = int_to_ptr.vmem [resolvable:$true] %s15
      %21 = dma.hbm_to_vmem [thread:$0]  %s0, 2560, %s16, [#allocation3], 256, 256, 16
    $region5: #{tpu_custom_call.1} parent=1 // pred_fallthru
      _
    // Predicated region
    $region6: #{tpu_custom_call.1} parent=1 // pred_check
      _
    $region7: #{tpu_custom_call.1} parent=1 // pred_check_branch
      %23 = sbr.rel (0) target = $region9
    $region8: #{tpu_custom_call.1} parent=1 // pred_region
      %s25 = ssub.s32 128, 128
      %26 = vsyncadd [#allocation6], %s25
      %s28 = sshll.u32 [#allocation5], 4
      %s29 = int_to_ptr.vmem [resolvable:$true] %s28
      %31 = dma.hbm_to_vmem [thread:$0]  %s1, 128, %s29, [#allocation6]
    $region9: #{tpu_custom_call.1} parent=1 // pred_fallthru
      _
    // Predicated region
    $region10: #{tpu_custom_call.1} parent=1 // pred_check
      _
    $region11: #{tpu_custom_call.1} parent=1 // pred_check_branch
      %33 = sbr.rel (0) target = $region13
    $region12: #{tpu_custom_call.1} parent=1 // pred_region
      %34 = dma.done [#allocation3], 2560
    $region13: #{tpu_custom_call.1} parent=1 // pred_fallthru
      _
    // Predicated region
    $region14: #{tpu_custom_call.1} parent=1 // pred_check
      _
    $region15: #{tpu_custom_call.1} parent=1 // pred_check_branch
      %36 = sbr.rel (0) target = $region17
    $region16: #{tpu_custom_call.1} parent=1 // pred_region
      %37 = dma.done [#allocation6], 128
    $region17: #{tpu_custom_call.1} parent=1 // pred_fallthru
      _
    %v38 = vld [vmem:[#allocation5] sm:$0xff]
    %v39 = vld [vmem:[#allocation2] sm:$0xff]
    %v40 = vld [vmem:[#allocation2 + $0x8] sm:$0xff]
    %v41 = vld [vmem:[#allocation2 + $0x10] sm:$0xff]
    %v42 = vld [vmem:[#allocation2 + $0x18] sm:$0xff]
    %v43 = vld [vmem:[#allocation2 + $0x20] sm:$0xff]
    %v44 = vld [vmem:[#allocation2 + $0x28] sm:$0xff]
    %v45 = vld [vmem:[#allocation2 + $0x30] sm:$0xff]
    %v46 = vld [vmem:[#allocation2 + $0x38] sm:$0xff]
    %v47 = vld [vmem:[#allocation2 + $0x40] sm:$0xff]
    %v48 = vld [vmem:[#allocation2 + $0x48] sm:$0xff]
    %vm49 = vcmask 326656
    %v51 = vsel %vm49, %v38, 0
    %53 = vmatprep.subr.mxu0 0.0
    %54 = vmatpush1.msra.mxu0 0.0
    %55 = vmatprep.subr.mxu0 0.0
    %56 = vmatpush1.msra.mxu0 0.0
    %57 = vmatprep.subr.mxu0 0.0
    %58 = vmatpush1.msra.mxu0 0.0
    %59 = vmatprep.subr.mxu0 0.0
    %60 = vmatpush1.msra.mxu0 0.0
    %61 = vmatprep.subr.mxu0 0.0
    %62 = vmatpush1.msra.mxu0 0.0
    %63 = vmatprep.subr.mxu0 0.0
    %64 = vmatpush1.msra.mxu0 0.0
    %65 = vmatprep.subr.mxu0 0.0
    %66 = vmatpush1.msra.mxu0 0.0
    %67 = vmatprep.subr.mxu0 0.0
    %68 = vmatpush1.msra.mxu0 0.0
    %69 = vmatprep.subr.mxu0 0.0
    %70 = vmatpush1.msra.mxu0 0.0
    %71 = vmatprep.subr.mxu0 0.0
    %72 = vmatpush1.msra.mxu0 0.0
    %73 = vmatprep.subr.mxu0 0.0
    %74 = vmatpush1.msra.mxu0 0.0
    %75 = vmatprep.subr.mxu0 %v48
    %76 = vmatpush1.msra.mxu0 %v47
    %77 = vmatprep.subr.mxu0 %v46
    %78 = vmatpush1.msra.mxu0 %v45
    %79 = vmatprep.subr.mxu0 %v44
    %80 = vmatpush1.msra.mxu0 %v43
    %81 = vmatprep.subr.mxu0 %v42
    %82 = vmatpush1.msra.mxu0 %v41
    %83 = vmatprep.subr.mxu0 %v40
    %84 = vmatpush1.msra.mxu0 %v39
    %85 = vmatprep.subr.mxu0 0.0
    %86 = vmatpush2.msra.mxu0 0.0
    %87 = vmatprep.subr.mxu0 0.0
    %88 = vmatpush2.msra.mxu0 0.0
    %89 = vmatprep.subr.mxu0 0.0
    %90 = vmatpush2.msra.mxu0 0.0
    %91 = vmatprep.subr.mxu0 0.0
    %92 = vmatpush2.msra.mxu0 0.0
    %93 = vmatprep.subr.mxu0 0.0
    %94 = vmatpush2.msra.mxu0 0.0
    %95 = vmatprep.subr.mxu0 0.0
    %96 = vmatpush2.msra.mxu0 0.0
    %97 = vmatprep.subr.mxu0 0.0
    %98 = vmatpush2.msra.mxu0 0.0
    %99 = vmatprep.subr.mxu0 0.0
    %100 = vmatpush2.msra.mxu0 0.0
    %101 = vmatprep.subr.mxu0 0.0
    %102 = vmatpush2.msra.mxu0 0.0
    %103 = vmatprep.subr.mxu0 0.0
    %104 = vmatpush2.msra.mxu0 0.0
    %105 = vmatprep.subr.mxu0 0.0
    %106 = vmatpush2.msra.mxu0 0.0
    %107 = vmatprep.subr.mxu0 0.0
    %108 = vmatpush2.msra.mxu0 0.0
    %109 = vmatprep.subr.mxu0 0.0
    %110 = vmatpush2.msra.mxu0 0.0
    %111 = vmatprep.subr.mxu0 0.0
    %112 = vmatpush2.msra.mxu0 0.0
    %113 = vmatprep.subr.mxu0 0.0
    %114 = vmatpush2.msra.mxu0 0.0
    %115 = vmatprep.subr.mxu0 0.0
    %116 = vmatpush2.msra.mxu0 0.0
    %117 = vmatprep.mubr.f32.mxu0 0.0
    %118 = vmatmul.mubr.f32.gmra.mxu0 %v51
    %v119 = vpop.f32.mrf.mxu0
    %v120 = vadd.f32 0.0, %v119
    %v121 = vpop.f32.mrf.mxu0
    %v122 = vadd.f32 0.0, %v121
    %123 = vdwg.mxu0
    %v124 = vmax.f32 %v120, 0.0
    %v125 = vmax.f32 %v122, 0.0
    %126 = vst [vmem:[#allocation7] sm:$0xff] %v124
    %127 = vst [vmem:[#allocation7 + $0x8] sm:$0xff] %v125
    %s128 = scalar_lea.vmem [#allocation2], 80
    %v129 = vld [vmem:[%s128] sm:$0xff]
    %v130 = vld [vmem:[%s128 + $0x8] sm:$0xff]
    %v131 = vld [vmem:[%s128 + $0x10] sm:$0xff]
    %v132 = vld [vmem:[%s128 + $0x18] sm:$0xff]
    %v133 = vld [vmem:[%s128 + $0x20] sm:$0xff]
    %v134 = vld [vmem:[%s128 + $0x28] sm:$0xff]
    %v135 = vld [vmem:[%s128 + $0x30] sm:$0xff]
    %v136 = vld [vmem:[%s128 + $0x38] sm:$0xff]
    %v137 = vld [vmem:[%s128 + $0x40] sm:$0xff]
    %v138 = vld [vmem:[%s128 + $0x48] sm:$0xff]
    %139 = vmatprep.subr.mxu0 0.0
    %140 = vmatpush1.msra.mxu0 0.0
    %141 = vmatprep.subr.mxu0 0.0
    %142 = vmatpush1.msra.mxu0 0.0
    %143 = vmatprep.subr.mxu0 0.0
    %144 = vmatpush1.msra.mxu0 0.0
    %145 = vmatprep.subr.mxu0 0.0
    %146 = vmatpush1.msra.mxu0 0.0
    %147 = vmatprep.subr.mxu0 0.0
    %148 = vmatpush1.msra.mxu0 0.0
    %149 = vmatprep.subr.mxu0 0.0
    %150 = vmatpush1.msra.mxu0 0.0
    %151 = vmatprep.subr.mxu0 0.0
    %152 = vmatpush1.msra.mxu0 0.0
    %153 = vmatprep.subr.mxu0 0.0
    %154 = vmatpush1.msra.mxu0 0.0
    %155 = vmatprep.subr.mxu0 0.0
    %156 = vmatpush1.msra.mxu0 0.0
    %157 = vmatprep.subr.mxu0 0.0
    %158 = vmatpush1.msra.mxu0 0.0
    %159 = vmatprep.subr.mxu0 0.0
    %160 = vmatpush1.msra.mxu0 0.0
    %161 = vmatprep.subr.mxu0 %v138
    %162 = vmatpush1.msra.mxu0 %v137
    %163 = vmatprep.subr.mxu0 %v136
    %164 = vmatpush1.msra.mxu0 %v135
    %165 = vmatprep.subr.mxu0 %v134
    %166 = vmatpush1.msra.mxu0 %v133
    %167 = vmatprep.subr.mxu0 %v132
    %168 = vmatpush1.msra.mxu0 %v131
    %169 = vmatprep.subr.mxu0 %v130
    %170 = vmatpush1.msra.mxu0 %v129
    %171 = vmatprep.subr.mxu0 0.0
    %172 = vmatpush2.msra.mxu0 0.0
    %173 = vmatprep.subr.mxu0 0.0
    %174 = vmatpush2.msra.mxu0 0.0
    %175 = vmatprep.subr.mxu0 0.0
    %176 = vmatpush2.msra.mxu0 0.0
    %177 = vmatprep.subr.mxu0 0.0
    %178 = vmatpush2.msra.mxu0 0.0
    %179 = vmatprep.subr.mxu0 0.0
    %180 = vmatpush2.msra.mxu0 0.0
    %181 = vmatprep.subr.mxu0 0.0
    %182 = vmatpush2.msra.mxu0 0.0
    %183 = vmatprep.subr.mxu0 0.0
    %184 = vmatpush2.msra.mxu0 0.0
    %185 = vmatprep.subr.mxu0 0.0
    %186 = vmatpush2.msra.mxu0 0.0
    %187 = vmatprep.subr.mxu0 0.0
    %188 = vmatpush2.msra.mxu0 0.0
    %189 = vmatprep.subr.mxu0 0.0
    %190 = vmatpush2.msra.mxu0 0.0
    %191 = vmatprep.subr.mxu0 0.0
    %192 = vmatpush2.msra.mxu0 0.0
    %193 = vmatprep.subr.mxu0 0.0
    %194 = vmatpush2.msra.mxu0 0.0
    %195 = vmatprep.subr.mxu0 0.0
    %196 = vmatpush2.msra.mxu0 0.0
    %197 = vmatprep.subr.mxu0 0.0
    %198 = vmatpush2.msra.mxu0 0.0
    %199 = vmatprep.subr.mxu0 0.0
    %200 = vmatpush2.msra.mxu0 0.0
    %201 = vmatprep.subr.mxu0 0.0
    %202 = vmatpush2.msra.mxu0 0.0
    %203 = vmatprep.mubr.f32.mxu0 0.0
    %204 = vmatmul.mubr.f32.gmra.mxu0 %v51
    %v205 = vpop.f32.mrf.mxu0
    %v206 = vadd.f32 0.0, %v205
    %v207 = vpop.f32.mrf.mxu0
    %v208 = vadd.f32 0.0, %v207
    %209 = vdwg.mxu0
    %v210 = vmax.f32 %v206, 0.0
    %v211 = vmax.f32 %v208, 0.0
    %s212 = scalar_lea.vmem [#allocation7], 16
    %213 = vst [vmem:[%s212] sm:$0xff] %v210
    %214 = vst [vmem:[%s212 + $0x8] sm:$0xff] %v211
    // Predicated region
    $region18: #{tpu_custom_call.1} parent=1 // pred_check
      _
    $region19: #{tpu_custom_call.1} parent=1 // pred_check_branch
      %216 = sbr.rel (0) target = $region21
    $region20: #{tpu_custom_call.1} parent=1 // pred_region
      %s218 = ssub.s32 512, 512
      %219 = vsyncadd [#allocation4], %s218
      %s220 = sshll.u32 [#allocation7], 4
      %s221 = int_to_ptr.vmem [resolvable:$true] %s220
      %226 = dma.vmem_to_hbm [thread:$0]  %s221, 512, %s2, [#allocation4], 256, 256, 16
    $region21: #{tpu_custom_call.1} parent=1 // pred_fallthru
      _
    // Predicated region
    $region22: #{tpu_custom_call.1} parent=1 // pred_check
      _
    $region23: #{tpu_custom_call.1} parent=1 // pred_check_branch
      %228 = sbr.rel (0) target = $region25
    $region24: #{tpu_custom_call.1} parent=1 // pred_region
      %229 = dma.done [#allocation4], 512
    $region25: #{tpu_custom_call.1} parent=1 // pred_fallthru
      _
    %230 = vsyncpa [#allocation3], 1
    %231 = vsyncpa [#allocation6], 1
    %232 = vsyncpa [#allocation4], 1

</llo_original>
